<compile_context>
chip_gen: v5e
topology: v5e:2x2
jax: 0.10.0
libtpu: 0.0.40
codegen_flags: <defaults>
</compile_context>

<pallas_src>
import functools

import jax
import jax.numpy as jnp
from jax.experimental import pallas as pl
from jax.experimental.pallas import tpu as pltpu


def _asl_kernel(p_ref, w_ref, shift_ref, o_ref):
    # p_ref:     (TM, KH*KW*Cin)   bf16  im2col patch rows (one M tile)
    # w_ref:     (KH*KW*Cin, Cpad) bf16  BN-scale-folded conv weights, Cout padded to 128
    # shift_ref: (1, Cpad)         f32   beta + (conv_bias - mean)*scale - v_th
    # o_ref:     (TM, Cpad)        bf16  spikes (0/1)
    v = jnp.dot(p_ref[...], w_ref[...], preferred_element_type=jnp.float32)
    v = v + shift_ref[...]                     # conv bias + BatchNorm(eval) + (-v_th), fused
    o_ref[...] = (v >= 0.0).astype(o_ref.dtype)  # LIF single step, v0 = 0
    # TODO(synk): multi-timestep LIF recurrence (membrane decay / reset across T) is not
    # expressed by this single-call forward; only the single-step spike is implemented.


def aggregated_spiking_layer(x_nchw, w_oihw, conv_bias, gamma, beta, run_mean, run_var,
                             *, eps=1e-5, v_th=0.5):
    B, Cin, H, W = x_nchw.shape
    Cout, Cin2, KH, KW = w_oihw.shape
    assert Cin2 == Cin and KH % 2 == 1 and KW % 2 == 1
    ph, pw = KH // 2, KW // 2
    LANES = 128
    Cpad = ((Cout + LANES - 1) // LANES) * LANES
    Kdim = KH * KW * Cin

    f32 = jnp.float32
    # ---- fold BatchNorm(eval) + conv bias + threshold into weights / additive shift ----
    inv_std = jax.lax.rsqrt(run_var.astype(f32) + f32(eps))
    scale = gamma.astype(f32) * inv_std                                      # (Cout,)
    shift = beta.astype(f32) + (conv_bias.astype(f32) - run_mean.astype(f32)) * scale
    w_s = w_oihw.astype(f32) * scale[:, None, None, None]                    # (Cout, Cin, KH, KW)
    w_mat = jnp.transpose(w_s, (2, 3, 1, 0)).reshape(Kdim, Cout)             # (kh*kw*cin, Cout)
    w_mat = jnp.pad(w_mat, ((0, 0), (0, Cpad - Cout))).astype(jnp.bfloat16)
    shift_p = (jnp.pad(shift, (0, Cpad - Cout)) - f32(v_th)).reshape(1, Cpad)

    # ---- wrapper-side im2col: lane-dense (KH*KW*Cin) contraction dim, taps ordered
    #      (kh, kw, cin) to match the weight layout above ----
    x = jnp.transpose(x_nchw, (0, 2, 3, 1))                                  # NHWC
    xpad = jnp.pad(x, ((0, 0), (ph, ph), (pw, pw), (0, 0)))
    taps = [xpad[:, kh:kh + H, kw:kw + W, :] for kh in range(KH) for kw in range(KW)]
    patches = jnp.concatenate(taps, axis=-1).reshape(B * H * W, Kdim).astype(jnp.bfloat16)

    # batch folded into M; grid over M tiles (parallel -> shards across TCs on v7x)
    M = B * H * W
    TM = 128 if M >= 128 else ((M + 7) // 8) * 8
    Mpad = ((M + TM - 1) // TM) * TM
    if Mpad != M:
        patches = jnp.pad(patches, ((0, Mpad - M), (0, 0)))
    nsteps = Mpad // TM

    flops = 2 * M * Kdim * Cout
    bytes_accessed = (Mpad * Kdim * 2 + Kdim * Cpad * 2 + Cpad * 4 + Mpad * Cpad * 2)

    out_flat = pl.pallas_call(
        _asl_kernel,
        out_shape=jax.ShapeDtypeStruct((Mpad, Cpad), jnp.bfloat16),
        grid_spec=pltpu.PrefetchScalarGridSpec(
            num_scalar_prefetch=0,
            grid=(nsteps,),
            in_specs=[
                pl.BlockSpec((TM, Kdim), lambda i: (i, 0)),     # im2col patch rows
                pl.BlockSpec((Kdim, Cpad), lambda i: (0, 0)),   # weights (resident)
                pl.BlockSpec((1, Cpad), lambda i: (0, 0)),      # folded shift (resident)
            ],
            out_specs=pl.BlockSpec((TM, Cpad), lambda i: (i, 0)),
        ),
        compiler_params=pltpu.CompilerParams(
            dimension_semantics=("parallel",),
        ),
        cost_estimate=pl.CostEstimate(flops=flops, transcendentals=0,
                                      bytes_accessed=bytes_accessed),
    )(patches, w_mat, shift_p)

    # glue back to the module's NCHW float output (drop lane/M padding)
    out = out_flat[:M, :Cout].reshape(B, H, W, Cout)
    return jnp.transpose(out, (0, 3, 1, 2)).astype(jnp.float32)


if __name__ == "__main__":
    key = jax.random.PRNGKey(0)
    k1, k2, k3, k4, k5, k6, k7 = jax.random.split(key, 7)

    B, Cin, H, W = 2, 4, 16, 16
    Cout = 8
    V_TH = 0.5

    # deterministic synthetic parameters (Conv2d(Cin,Cout,3,pad=1,bias) + BatchNorm2d(Cout) eval)
    x = jax.random.normal(k1, (B, Cin, H, W), jnp.float32)
    w = jax.random.normal(k2, (Cout, Cin, 3, 3), jnp.float32) * 0.2
    b = jax.random.normal(k3, (Cout,), jnp.float32) * 0.1
    gamma = 0.5 + jax.random.uniform(k4, (Cout,), jnp.float32)
    beta = jax.random.normal(k5, (Cout,), jnp.float32) * 0.1
    run_mean = jax.random.normal(k6, (Cout,), jnp.float32) * 0.1
    run_var = 0.5 + jax.random.uniform(k7, (Cout,), jnp.float32)

    spikes = aggregated_spiking_layer(x, w, b, gamma, beta, run_mean, run_var, v_th=V_TH)
    spikes = jax.block_until_ready(spikes)

    # pure-JAX f32 reference (NCHW conv -> BN(eval) -> threshold)
    z = jax.lax.conv_general_dilated(x, w, (1, 1), ((1, 1), (1, 1)),
                                     dimension_numbers=("NCHW", "OIHW", "NCHW"))
    z = z + b.reshape(1, Cout, 1, 1)
    inv_std = 1.0 / jnp.sqrt(run_var + 1e-5)
    zbn = ((z - run_mean.reshape(1, Cout, 1, 1)) * (gamma * inv_std).reshape(1, Cout, 1, 1)
           + beta.reshape(1, Cout, 1, 1))
    ref = (zbn >= V_TH).astype(jnp.float32)

    assert spikes.shape == ref.shape == (B, Cout, H, W)
    assert bool(jnp.all((spikes == 0.0) | (spikes == 1.0)))
    # bf16 inputs/weights can flip spikes whose membrane potential lands ~at v_th vs. the
    # f32 reference op order; allow a small mismatch fraction (expected ~0.1%).
    mismatch = float(jnp.mean(jnp.abs(spikes - ref)))
    assert mismatch < 0.02, f"spike mismatch fraction {mismatch}"
    print("KERNEL_OK")
</pallas_src>

<mosaic_0001>
module attributes {stable_mosaic.version = 11 : i64} {
  func.func @_asl_kernel(%arg0: i32, %arg1: memref<128x36xbf16, #tpu.memory_space<vmem>>, %arg2: memref<36x128xbf16, #tpu.memory_space<vmem>>, %arg3: memref<1x128xf32, #tpu.memory_space<vmem>>, %arg4: memref<128x128xbf16, #tpu.memory_space<vmem>>) attributes {dimension_semantics = [#tpu.dimension_semantics<parallel>], iteration_bounds = array<i64: 4>, scalar_prefetch = 0 : i64, scratch_operands = 0 : i64, tpu.core_type = #tpu.core_type<tc>, window_params = [{transform_indices = @transform_0, window_bounds = array<i64: 128, 36>}, {pipeline_mode = #tpu.pipeline_mode<synchronous>, transform_indices = @transform_1, window_bounds = array<i64: 36, 128>}, {pipeline_mode = #tpu.pipeline_mode<synchronous>, transform_indices = @transform_2, window_bounds = array<i64: 1, 128>}, {transform_indices = @transform_3, window_bounds = array<i64: 128, 128>}]} {
    %c0 = arith.constant 0 : index
    %c0_0 = arith.constant 0 : index
    %0 = vector.load %arg1[%c0, %c0_0] : memref<128x36xbf16, #tpu.memory_space<vmem>>, vector<128x36xbf16>
    %c0_1 = arith.constant 0 : index
    %c0_2 = arith.constant 0 : index
    %1 = vector.load %arg2[%c0_1, %c0_2] : memref<36x128xbf16, #tpu.memory_space<vmem>>, vector<36x128xbf16>
    %cst = arith.constant dense<0.000000e+00> : vector<128x128xf32>
    %2 = tpu.matmul %0, %1, %cst {dimension_numbers = #tpu.dot_dimension_numbers<[1], [0], [0], [1], [0, 0, 1, 1], [], []>} : vector<128x36xbf16>, vector<36x128xbf16>, vector<128x128xf32> -> vector<128x128xf32>
    %c0_3 = arith.constant 0 : index
    %c0_4 = arith.constant 0 : index
    %3 = vector.load %arg3[%c0_3, %c0_4] : memref<1x128xf32, #tpu.memory_space<vmem>>, vector<1x128xf32>
    %4 = vector.broadcast %3 : vector<1x128xf32> to vector<128x128xf32>
    %5 = arith.addf %2, %4 : vector<128x128xf32>
    %cst_5 = arith.constant 0.000000e+00 : f32
    %6 = vector.broadcast %cst_5 : f32 to vector<128x128xf32>
    %7 = arith.cmpf oge, %5, %6 : vector<128x128xf32>
    %8 = arith.extui %7 : vector<128x128xi1> to vector<128x128xi32>
    %9 = arith.sitofp %8 : vector<128x128xi32> to vector<128x128xf32>
    %10 = arith.truncf %9 : vector<128x128xf32> to vector<128x128xbf16>
    %c0_6 = arith.constant 0 : index
    %c0_7 = arith.constant 0 : index
    %11 = vector.load %arg4[%c0_6, %c0_7] : memref<128x128xbf16, #tpu.memory_space<vmem>>, vector<128x128xbf16>
    tpu.vector_store %arg4[%c0_6, %c0_7], %10 {strides = array<i32>} : memref<128x128xbf16, #tpu.memory_space<vmem>>, vector<128x128xbf16>,
    return
  }
  func.func @transform_0(%arg0: i32) -> (i32, i32) {
    %c0_i32 = arith.constant 0 : i32
    %c0_i32_0 = arith.constant 0 : i32
    return %arg0, %c0_i32 : i32, i32
  }
  func.func @transform_1(%arg0: i32) -> (i32, i32) {
    %c0_i32 = arith.constant 0 : i32
    %c0_i32_0 = arith.constant 0 : i32
    %c0_i32_1 = arith.constant 0 : i32
    return %c0_i32, %c0_i32_0 : i32, i32
  }
  func.func @transform_2(%arg0: i32) -> (i32, i32) {
    %c0_i32 = arith.constant 0 : i32
    %c0_i32_0 = arith.constant 0 : i32
    %c0_i32_1 = arith.constant 0 : i32
    return %c0_i32, %c0_i32_0 : i32, i32
  }
  func.func @transform_3(%arg0: i32) -> (i32, i32) {
    %c0_i32 = arith.constant 0 : i32
    %c0_i32_0 = arith.constant 0 : i32
    return %arg0, %c0_i32 : i32, i32
  }
}

</mosaic_0001>

<llo_original>
// kernel: tpu_custom_call.1
$region0: #{tpu_custom_call.1}
  #allocation0 [shape = 'u32[]', space=smem, size = 0x4, offset = 0x4, fixed_abs, tag = 'smem constant byte address 0x4 - core index']
  #allocation1 [shape = 'u32[72,128]{1,0:T(1,128)}', space=vmem, size = 0x9000, scoped, tag = 'internal scratch']
  %s0 = inlined_call_operand.vmem [shape: bf16[512,36], index: 0, kind: input, shape index: {}]
  %s1 = inlined_call_operand.vmem [shape: bf16[36,128], index: 1, kind: input, shape index: {}]
  %s2 = inlined_call_operand.vmem [shape: f32[1,128], index: 2, kind: input, shape index: {}]
  %s3 = inlined_call_operand.hbm [shape: bf16[512,128], index: 3, kind: output, shape index: {}]
  %s4 = sld [smem:[#allocation0]]
  $region45: #{tpu_custom_call.1} parent=0
    _
  %s6 = ssub.s32 1, %s4
  %s7 = scalar_select 0, %s6, %s4
  $region1: #{tpu_custom_call.1} parent=0
    #allocation2 [shape = 'u8[65536]{0}', space=vmem, size = 0x10000, scoped, tag = 'output window, operand 0']
    #allocation3 [shape = 's32[2]{0}', space=sflag, size = 0x8, scoped, tag = 'scoped memory for tpu_custom_call.1']
    %8 = vsyncpa [#allocation3], 0
    %s9 = scalar_lea.sflag [#allocation3], 1
    %10 = vsyncpa %s9, 0
    loop: start=0, step=1, limit=6
    $region2: #{tpu_custom_call.1} parent=1 // loop_pre_header
      _
    $region3: #{tpu_custom_call.1} parent=1 // loop_header
      %s12 = sphi 0, %s16
      %p13 = scmp.ge.s32.totalorder %s12, 6
      %s22 = sphi 0, %s24
      %s25 = sphi 0, %s22
      %s26 = sphi 0, %s25
      %s42 = sphi 0, %s26
      %s46 = sphi 0, %s46
      %s48 = sphi 0, %s46
      %s49 = sphi 0, %s48
      %s63 = sphi 0, %s49
      %s67 = sphi 0, %s67
      %s69 = sphi 0, %s67
      %s70 = sphi 0, %s69
      %s84 = sphi 0, %s70
      %s90 = sphi 0, %s92
      %s93 = sphi 0, %s90
      %s94 = sphi 0, %s93
      %s110 = sphi 0, %s94
    $region4: #{tpu_custom_call.1} parent=1 // loop_header_branch
      %15 = sbr.rel (%p13) target = $region8
    $region5: #{tpu_custom_call.1} parent=1 // loop_body
      %s17 = ssub.s32 %s12, 1
      %s18 = ssub.s32 %s12, 2
      %s19 = sadd.s32 %s12, 1
      %s20 = ssub.s32 %s12, %s19
      %p21 = scmp.eq.s32.totalorder %s20, 0
      %s23 = sadd.s32 %s22, 1
      %s24 = scalar_select %p21, %s22, %s23
      %p27 = pneg %p21
      %p28 = scmp.eq.s32.totalorder %s12, 3
      %p29 = por %p27, %p28
      %p30 = scmp.ne.s32.totalorder %s22, %s25
      %p31 = scmp.eq.s32.totalorder %s12, 0
      %p32 = por %p30, %p31
      %p33 = scmp.ne.s32.totalorder %s22, %s25
      %p34 = scmp.eq.s32.totalorder %s17, 3
      %p35 = por %p33, %p34
      %p36 = scmp.ne.s32.totalorder %s25, %s26
      %p37 = scmp.eq.s32.totalorder %s17, 0
      %p38 = por %p36, %p37
      %p39 = scmp.ne.s32.totalorder %s25, %s26
      %p40 = scmp.eq.s32.totalorder %s18, 3
      %p41 = por %p39, %p40
      %p43 = scmp.ne.s32.totalorder %s26, %s42
      %p44 = scmp.eq.s32.totalorder %s18, 0
      %p45 = por %p43, %p44
      %s47 = sadd.s32 %s46, 1
      %p50 = scmp.eq.s32.totalorder %s12, 3
      %p51 = scmp.ne.s32.totalorder %s46, %s48
      %p52 = scmp.eq.s32.totalorder %s12, 0
      %p53 = por %p51, %p52
      %p54 = scmp.ne.s32.totalorder %s46, %s48
      %p55 = scmp.eq.s32.totalorder %s17, 3
      %p56 = por %p54, %p55
      %p57 = scmp.ne.s32.totalorder %s48, %s49
      %p58 = scmp.eq.s32.totalorder %s17, 0
      %p59 = por %p57, %p58
      %p60 = scmp.ne.s32.totalorder %s48, %s49
      %p61 = scmp.eq.s32.totalorder %s18, 3
      %p62 = por %p60, %p61
      %p64 = scmp.ne.s32.totalorder %s49, %s63
      %p65 = scmp.eq.s32.totalorder %s18, 0
      %p66 = por %p64, %p65
      %s68 = sadd.s32 %s67, 1
      %p71 = scmp.eq.s32.totalorder %s12, 3
      %p72 = scmp.ne.s32.totalorder %s67, %s69
      %p73 = scmp.eq.s32.totalorder %s12, 0
      %p74 = por %p72, %p73
      %p75 = scmp.ne.s32.totalorder %s67, %s69
      %p76 = scmp.eq.s32.totalorder %s17, 3
      %p77 = por %p75, %p76
      %p78 = scmp.ne.s32.totalorder %s69, %s70
      %p79 = scmp.eq.s32.totalorder %s17, 0
      %p80 = por %p78, %p79
      %p81 = scmp.ne.s32.totalorder %s69, %s70
      %p82 = scmp.eq.s32.totalorder %s18, 3
      %p83 = por %p81, %p82
      %p85 = scmp.ne.s32.totalorder %s70, %s84
      %p86 = scmp.eq.s32.totalorder %s18, 0
      %p87 = por %p85, %p86
      %s88 = ssub.s32 %s12, %s19
      %p89 = scmp.eq.s32.totalorder %s88, 0
      %s91 = sadd.s32 %s90, 1
      %s92 = scalar_select %p89, %s90, %s91
      %p95 = pneg %p89
      %p96 = scmp.eq.s32.totalorder %s12, 3
      %p97 = por %p95, %p96
      %p98 = scmp.ne.s32.totalorder %s90, %s93
      %p99 = scmp.eq.s32.totalorder %s12, 0
      %p100 = por %p98, %p99
      %p101 = scmp.ne.s32.totalorder %s90, %s93
      %p102 = scmp.eq.s32.totalorder %s17, 3
      %p103 = por %p101, %p102
      %p104 = scmp.ne.s32.totalorder %s93, %s94
      %p105 = scmp.eq.s32.totalorder %s17, 0
      %p106 = por %p104, %p105
      %p107 = scmp.ne.s32.totalorder %s93, %s94
      %p108 = scmp.eq.s32.totalorder %s18, 3
      %p109 = por %p107, %p108
      %p111 = scmp.ne.s32.totalorder %s94, %s110
      %p112 = scmp.eq.s32.totalorder %s18, 0
      %p113 = por %p111, %p112
      %p114 = scmp.le.s32.totalorder 1, %s12
      %p115 = scmp.lt.s32.totalorder %s12, 5
      %p116 = pnand %p114, %p115
      %p117 = pneg %p116
      // Predicated region
      $region9: #{tpu_custom_call.1} parent=5 // pred_check
        _
      $region10: #{tpu_custom_call.1} parent=5 // pred_check_branch
        %119 = sbr.rel (%p116) target = $region12
      $region11: #{tpu_custom_call.1} parent=5 // pred_region
        %s120 = ssub.s32 %s12, 1
        // Predicated region
        $region13: #{tpu_custom_call.1} parent=11 // pred_check
          %p121 = pneg %p59
        $region14: #{tpu_custom_call.1} parent=11 // pred_check_branch
          %123 = sbr.rel (%p121) target = $region16
        $region15: #{tpu_custom_call.1} parent=11 // pred_region
          _
        $region16: #{tpu_custom_call.1} parent=11 // pred_fallthru
          _
        // Predicated region
        $region17: #{tpu_custom_call.1} parent=11 // pred_check
          %p124 = pneg %p80
        $region18: #{tpu_custom_call.1} parent=11 // pred_check_branch
          %126 = sbr.rel (%p124) target = $region20
        $region19: #{tpu_custom_call.1} parent=11 // pred_region
          _
        $region20: #{tpu_custom_call.1} parent=11 // pred_fallthru
          _
      $region12: #{tpu_custom_call.1} parent=5 // pred_fallthru
        _
      %p127 = scmp.lt.s32.totalorder %s12, 4
      // Predicated region
      $region21: #{tpu_custom_call.1} parent=5 // pred_check
        %p128 = pneg %p127
      $region22: #{tpu_custom_call.1} parent=5 // pred_check_branch
        %130 = sbr.rel (%p128) target = $region24
      $region23: #{tpu_custom_call.1} parent=5 // pred_region
        // Predicated region
        $region25: #{tpu_custom_call.1} parent=23 // pred_check
          %p131 = pneg %p32
        $region26: #{tpu_custom_call.1} parent=23 // pred_check_branch
          %133 = sbr.rel (%p131) target = $region28
        $region27: #{tpu_custom_call.1} parent=23 // pred_region
          %s134 = smul.u32 16, %s12
          %p135 = scmp.lt.s32.totalorder %s134, 63
          %s136 = scalar_select %p135, %s134, 63
          %s137 = smul.addr %s136, 4
          %s138 = scalar_lea.vmem %s0, %s137
          %s139 = smul.u32 16, %s12
        $region28: #{tpu_custom_call.1} parent=23 // pred_fallthru
          _
      $region24: #{tpu_custom_call.1} parent=5 // pred_fallthru
        _
      %p140 = scmp.le.s32.totalorder 1, %s12
      %p141 = scmp.lt.s32.totalorder %s12, 5
      %p142 = pnand %p140, %p141
      %p143 = pneg %p142
      // Predicated region
      $region29: #{tpu_custom_call.1} parent=5 // pred_check
        _
      $region30: #{tpu_custom_call.1} parent=5 // pred_check_branch
        %145 = sbr.rel (%p142) target = $region32
      $region31: #{tpu_custom_call.1} parent=5 // pred_region
        %s146 = ssub.s32 %s12, 1
        %s147 = smul.u32 16, %s17
        %p148 = scmp.lt.s32.totalorder %s147, 63
        %s149 = scalar_select %p148, %s147, 63
        %s150 = smul.addr %s149, 4
        %s151 = scalar_lea.vmem %s0, %s150
        %p152 = pneg %p38
        %p153 = pneg %p35
        %p154 = pneg %p59
        %p155 = pneg %p56
        %p156 = pneg %p80
        %p157 = pneg %p77
        %p158 = pneg %p106
        %p159 = pneg %p103
        %s160 = sand.u32 %s93, 1
        %s161 = scalar_lea.sflag [#allocation3], %s160
        %s162 = sand.u32 %s93, 1
        %s163 = smul.addr %s162, 64
        %s164 = scalar_lea.vmem [#allocation2], %s163
        %s165 = smul.u32 16, %s17
        %p166 = scmp.lt.s32.totalorder %s165, 63
        %s167 = scalar_select %p166, %s165, 63
        %s168 = smul.addr %s167, 4
        %s169 = scalar_lea.vmem %s0, %s168
        %s170 = smul.u32 16, %s17
        %s171 = smul.u32 16, %s17
        %v173 = vld [vmem:[%s169] sm:$0xf]
        %v174 = vld [vmem:[%s169 + $0x4] sm:$0xf]
        %v175 = vld [vmem:[%s169 + $0x8] sm:$0xf]
        %v176 = vld [vmem:[%s169 + $0xc] sm:$0xf]
        %v177 = vld [vmem:[%s169 + $0x10] sm:$0xf]
        %v178 = vld [vmem:[%s169 + $0x14] sm:$0xf]
        %v179 = vld [vmem:[%s169 + $0x18] sm:$0xf]
        %v180 = vld [vmem:[%s169 + $0x1c] sm:$0xf]
        %v181 = vld [vmem:[%s169 + $0x20] sm:$0xf]
        %v182 = vld [vmem:[%s169 + $0x24] sm:$0xf]
        %v183 = vld [vmem:[%s169 + $0x28] sm:$0xf]
        %v184 = vld [vmem:[%s169 + $0x2c] sm:$0xf]
        %v185 = vld [vmem:[%s169 + $0x30] sm:$0xf]
        %v186 = vld [vmem:[%s169 + $0x34] sm:$0xf]
        %v187 = vld [vmem:[%s169 + $0x38] sm:$0xf]
        %v188 = vld [vmem:[%s169 + $0x3c] sm:$0xf]
        %v189 = vld [vmem:[%s1] sm:$0xf]
        %v190 = vld [vmem:[%s1 + $0x4] sm:$0xf]
        %v191 = vld [vmem:[%s1 + $0x8] sm:$0xf]
        %v192 = vld [vmem:[%s1 + $0xc] sm:$0xf]
        %v193 = vld [vmem:[%s1 + $0x10] sm:$0x3]
        %v194 = vld [vmem:[%s2] sm:$0x1]
        %v196 = vperm.slane %v194, 0
        %v214 = vunpack.c.l.b16 %v173
        %v215 = vunpack.c.l.b16 %v174
        %v216 = vunpack.c.l.b16 %v175
        %v217 = vunpack.c.l.b16 %v176
        %v218 = vunpack.c.l.b16 %v177
        %v219 = vunpack.c.l.b16 %v178
        %v220 = vunpack.c.l.b16 %v179
        %v221 = vunpack.c.l.b16 %v180
        %v222 = vunpack.c.l.b16 %v181
        %v223 = vunpack.c.l.b16 %v182
        %v224 = vunpack.c.l.b16 %v183
        %v225 = vunpack.c.l.b16 %v184
        %v226 = vunpack.c.l.b16 %v185
        %v227 = vunpack.c.l.b16 %v186
        %v228 = vunpack.c.l.b16 %v187
        %v229 = vunpack.c.l.b16 %v188
        %v230 = vpack.c.b16 %v215, %v214
        %v231 = vpack.c.b16 %v217, %v216
        %v232 = vpack.c.b16 %v219, %v218
        %v233 = vpack.c.b16 %v221, %v220
        %v234 = vpack.c.b16 %v223, %v222
        %v235 = vpack.c.b16 %v225, %v224
        %v236 = vpack.c.b16 %v227, %v226
        %v237 = vpack.c.b16 %v229, %v228
        %v243 = vunpack.c.l.b16 %v189
        %v244 = vunpack.c.l.b16 %v190
        %v245 = vunpack.c.l.b16 %v191
        %v246 = vunpack.c.l.b16 %v192
        %v247 = vunpack.c.l.b16 %v193
        %v248 = vpack.c.b16 %v244, %v243
        %v249 = vpack.c.b16 %v246, %v245
        %v250 = vpack.c.b16 %v247, %v247
        %vm253 = vcmask 293888
        %v255 = vsel %vm253, %v230, 0
        %v258 = vsel %vm253, %v231, 0
        %v261 = vsel %vm253, %v232, 0
        %v264 = vsel %vm253, %v233, 0
        %v267 = vsel %vm253, %v234, 0
        %v270 = vsel %vm253, %v235, 0
        %v273 = vsel %vm253, %v236, 0
        %v276 = vsel %vm253, %v237, 0
        %vm278 = vcmask 1041408
        %v280 = vsel %vm278, %v250, 0
        %282 = vmatpush.bf16.msra.mxu0 0
        %283 = vmatpush.bf16.msra.mxu0 0
        %284 = vmatpush.bf16.msra.mxu0 0
        %285 = vmatpush.bf16.msra.mxu0 0
        %286 = vmatpush.bf16.msra.mxu0 0
        %287 = vmatpush.bf16.msra.mxu0 %v280
        %288 = vmatpush.bf16.msra.mxu0 %v249
        %289 = vmatpush.bf16.msra.mxu0 %v248
        %290 = vmatmul.bf16.gmra.mxu0 %v255
        %v291 = vpop.f32.mrf.mxu0
        %v292 = vadd.f32 %v196, %v291
        %v293 = vpop.f32.mrf.mxu0
        %v294 = vadd.f32 %v196, %v293
        %295 = vmatmul.bf16.gmra.mxu0 %v258
        %v296 = vpop.f32.mrf.mxu0
        %v297 = vadd.f32 %v196, %v296
        %v298 = vpop.f32.mrf.mxu0
        %v299 = vadd.f32 %v196, %v298
        %300 = vmatmul.bf16.gmra.mxu0 %v261
        %v301 = vpop.f32.mrf.mxu0
        %v302 = vadd.f32 %v196, %v301
        %v303 = vpop.f32.mrf.mxu0
        %v304 = vadd.f32 %v196, %v303
        %305 = vmatmul.bf16.gmra.mxu0 %v264
        %v306 = vpop.f32.mrf.mxu0
        %v307 = vadd.f32 %v196, %v306
        %v308 = vpop.f32.mrf.mxu0
        %v309 = vadd.f32 %v196, %v308
        %310 = vmatmul.bf16.gmra.mxu0 %v267
        %v311 = vpop.f32.mrf.mxu0
        %v312 = vadd.f32 %v196, %v311
        %v313 = vpop.f32.mrf.mxu0
        %v314 = vadd.f32 %v196, %v313
        %315 = vmatmul.bf16.gmra.mxu0 %v270
        %v316 = vpop.f32.mrf.mxu0
        %v317 = vadd.f32 %v196, %v316
        %v318 = vpop.f32.mrf.mxu0
        %v319 = vadd.f32 %v196, %v318
        %320 = vmatmul.bf16.gmra.mxu0 %v273
        %v321 = vpop.f32.mrf.mxu0
        %v322 = vadd.f32 %v196, %v321
        %v323 = vpop.f32.mrf.mxu0
        %v324 = vadd.f32 %v196, %v323
        %325 = vmatmul.bf16.gmra.mxu0 %v276
        %v326 = vpop.f32.mrf.mxu0
        %v327 = vadd.f32 %v196, %v326
        %v328 = vpop.f32.mrf.mxu0
        %v329 = vadd.f32 %v196, %v328
        %330 = vdwg.mxu0
        %vm331 = vcmp.ge.f32.partialorder %v292, 0.0
        %vm332 = vcmp.ge.f32.partialorder %v294, 0.0
        %vm333 = vcmp.ge.f32.partialorder %v297, 0.0
        %vm334 = vcmp.ge.f32.partialorder %v299, 0.0
        %vm335 = vcmp.ge.f32.partialorder %v302, 0.0
        %vm336 = vcmp.ge.f32.partialorder %v304, 0.0
        %vm337 = vcmp.ge.f32.partialorder %v307, 0.0
        %vm338 = vcmp.ge.f32.partialorder %v309, 0.0
        %vm339 = vcmp.ge.f32.partialorder %v312, 0.0
        %vm340 = vcmp.ge.f32.partialorder %v314, 0.0
        %vm341 = vcmp.ge.f32.partialorder %v317, 0.0
        %vm342 = vcmp.ge.f32.partialorder %v319, 0.0
        %vm343 = vcmp.ge.f32.partialorder %v322, 0.0
        %vm344 = vcmp.ge.f32.partialorder %v324, 0.0
        %vm345 = vcmp.ge.f32.partialorder %v327, 0.0
        %vm346 = vcmp.ge.f32.partialorder %v329, 0.0
        %v347 = vsel %vm331, 1, 0
        %v348 = vsel %vm332, 1, 0
        %v349 = vsel %vm333, 1, 0
        %v350 = vsel %vm334, 1, 0
        %v351 = vsel %vm335, 1, 0
        %v352 = vsel %vm336, 1, 0
        %v353 = vsel %vm337, 1, 0
        %v354 = vsel %vm338, 1, 0
        %v355 = vsel %vm339, 1, 0
        %v356 = vsel %vm340, 1, 0
        %v357 = vsel %vm341, 1, 0
        %v358 = vsel %vm342, 1, 0
        %v359 = vsel %vm343, 1, 0
        %v360 = vsel %vm344, 1, 0
        %v361 = vsel %vm345, 1, 0
        %v362 = vsel %vm346, 1, 0
        %v363 = vcvt.s32.f32 %v347
        %v364 = vcvt.s32.f32 %v348
        %v365 = vcvt.s32.f32 %v349
        %v366 = vcvt.s32.f32 %v350
        %v367 = vcvt.s32.f32 %v351
        %v368 = vcvt.s32.f32 %v352
        %v369 = vcvt.s32.f32 %v353
        %v370 = vcvt.s32.f32 %v354
        %v371 = vcvt.s32.f32 %v355
        %v372 = vcvt.s32.f32 %v356
        %v373 = vcvt.s32.f32 %v357
        %v374 = vcvt.s32.f32 %v358
        %v375 = vcvt.s32.f32 %v359
        %v376 = vcvt.s32.f32 %v360
        %v377 = vcvt.s32.f32 %v361
        %v378 = vcvt.s32.f32 %v362
        %v379 = vpack.c.bf16 %v363, %v363
        %v380 = vpack.c.bf16 %v364, %v364
        %v381 = vpack.c.bf16 %v365, %v365
        %v382 = vpack.c.bf16 %v366, %v366
        %v383 = vpack.c.bf16 %v367, %v367
        %v384 = vpack.c.bf16 %v368, %v368
        %v385 = vpack.c.bf16 %v369, %v369
        %v386 = vpack.c.bf16 %v370, %v370
        %v387 = vpack.c.bf16 %v371, %v371
        %v388 = vpack.c.bf16 %v372, %v372
        %v389 = vpack.c.bf16 %v373, %v373
        %v390 = vpack.c.bf16 %v374, %v374
        %v391 = vpack.c.bf16 %v375, %v375
        %v392 = vpack.c.bf16 %v376, %v376
        %v393 = vpack.c.bf16 %v377, %v377
        %v394 = vpack.c.bf16 %v378, %v378
        %395 = vst [vmem:[%s164] sm:$0xf] %v379
        %396 = vst [vmem:[%s164 + $0x4] sm:$0xf] %v380
        %397 = vst [vmem:[%s164 + $0x8] sm:$0xf] %v381
        %398 = vst [vmem:[%s164 + $0xc] sm:$0xf] %v382
        %399 = vst [vmem:[%s164 + $0x10] sm:$0xf] %v383
        %400 = vst [vmem:[%s164 + $0x14] sm:$0xf] %v384
        %401 = vst [vmem:[%s164 + $0x18] sm:$0xf] %v385
        %402 = vst [vmem:[%s164 + $0x1c] sm:$0xf] %v386
        %403 = vst [vmem:[%s164 + $0x20] sm:$0xf] %v387
        %404 = vst [vmem:[%s164 + $0x24] sm:$0xf] %v388
        %405 = vst [vmem:[%s164 + $0x28] sm:$0xf] %v389
        %406 = vst [vmem:[%s164 + $0x2c] sm:$0xf] %v390
        %407 = vst [vmem:[%s164 + $0x30] sm:$0xf] %v391
        %408 = vst [vmem:[%s164 + $0x34] sm:$0xf] %v392
        %409 = vst [vmem:[%s164 + $0x38] sm:$0xf] %v393
        %410 = vst [vmem:[%s164 + $0x3c] sm:$0xf] %v394
        %s411 = sand.u32 %s93, 1
        %s412 = scalar_lea.sflag [#allocation3], %s411
        %s413 = sand.u32 %s93, 1
        %s414 = smul.addr %s413, 64
        %s415 = scalar_lea.vmem [#allocation2], %s414
        // Predicated region
        $region33: #{tpu_custom_call.1} parent=31 // pred_check
          %p416 = pneg %p103
        $region34: #{tpu_custom_call.1} parent=31 // pred_check_branch
          %418 = sbr.rel (%p416) target = $region36
        $region35: #{tpu_custom_call.1} parent=31 // pred_region
          %s419 = smul.u32 16, %s17
          %421 = vsyncadd %s412, 0
          %s422 = smul.addr %s419, 4
          %s423 = scalar_lea.hbm %s3, %s422
          %s424 = sshll.u32 %s415, 4
          %s425 = int_to_ptr.vmem [resolvable:$true] %s424
          %s426 = sshll.u32 %s423, 4
          %s427 = int_to_ptr.hbm [resolvable:$true] %s426
          %432 = dma.vmem_to_hbm [thread:$0]  %s425, 1024, %s427, %s412, 64, 64, 4
        $region36: #{tpu_custom_call.1} parent=31 // pred_fallthru
          _
      $region32: #{tpu_custom_call.1} parent=5 // pred_fallthru
        _
      %p433 = scmp.le.s32.totalorder 2, %s12
      // Predicated region
      $region37: #{tpu_custom_call.1} parent=5 // pred_check
        %p434 = pneg %p433
      $region38: #{tpu_custom_call.1} parent=5 // pred_check_branch
        %436 = sbr.rel (%p434) target = $region40
      $region39: #{tpu_custom_call.1} parent=5 // pred_region
        %s437 = ssub.s32 %s12, 2
        // Predicated region
        $region41: #{tpu_custom_call.1} parent=39 // pred_check
          %p438 = pneg %p109
        $region42: #{tpu_custom_call.1} parent=39 // pred_check_branch
          %440 = sbr.rel (%p438) target = $region44
        $region43: #{tpu_custom_call.1} parent=39 // pred_region
          %s441 = sand.u32 %s94, 1
          %s442 = scalar_lea.sflag [#allocation3], %s441
          %s443 = sand.u32 %s94, 1
          %s444 = smul.addr %s443, 64
          %s445 = scalar_lea.vmem [#allocation2], %s444
          %447 = dma.done %s442, 1024
        $region44: #{tpu_custom_call.1} parent=39 // pred_fallthru
          _
      $region40: #{tpu_custom_call.1} parent=5 // pred_fallthru
        _
    $region6: #{tpu_custom_call.1} parent=1 // loop_footer
      %s16 = sadd.s32 1, %s12
    $region7: #{tpu_custom_call.1} parent=1 // loop_footer_branch
      %11 = sbr.rel target = $region3
    $region8: #{tpu_custom_call.1} parent=1 // loop_exit
      _
    %448 = vsyncpa [#allocation3], 1
    %s449 = scalar_lea.sflag [#allocation3], 1
    %450 = vsyncpa %s449, 1

</llo_original>
